<compile_context>
chip_gen: v7x
topology: tpu7x:2x2x1
jax: 0.10.0
libtpu: 0.0.40
codegen_flags: <defaults>
</compile_context>

<pallas_src>
import functools

import numpy as np
import jax
import jax.numpy as jnp
from jax.experimental import pallas as pl
from jax.experimental.pallas import tpu as pltpu

# ---- PU21 "banding_glare" parameters (Mantiuk et al., PU21) -----------------
P0, P1, P2, P3, P4, P5, P6 = (
    0.353487901, 0.3734658629, 8.277049286e-05,
    0.9062562627, 0.02475839453, 0.04497279816, 1.151961946,
)
Y_MIN = 0.005          # minimum representable luminance (cd/m^2)
Y_MAX = 10000.0        # maximum representable luminance (cd/m^2)
Y_PEAK_SRGB = 100.0    # SDR/sRGB peak used when normalize_range_srgb=True


def _pu21_encode_np(y):
    y = np.asarray(y, np.float64)
    yp = np.power(y, P3)
    return P6 * (np.power((P0 + P1 * yp) / (1.0 + P2 * yp), P4) - P5)


# normalize_pu=True, normalize_pu_range_srgb=True: PU(Y_MIN)..PU(100) -> 0..1
PU_LO = float(_pu21_encode_np(Y_MIN))
PU_HI = float(_pu21_encode_np(Y_PEAK_SRGB))
PU_INV_RANGE = 1.0 / (PU_HI - PU_LO)


def _pu21_norm_np(y):
    return (_pu21_encode_np(y) - PU_LO) * PU_INV_RANGE


# ---- import-time fit: piecewise polynomial of g(u) = pu21_norm(2**u) --------
# u = log2(y) spans [log2(Y_MIN), log2(Y_MAX)].  Two equal-width segments,
# degree-14 power-basis polynomials (from a Chebyshev least-squares fit).
# Replaces 4 transcendentals + a divide per element with 1 log2 + ~30 VPU ops.
_U_LO = float(np.log2(Y_MIN))
_U_HI = float(np.log2(Y_MAX))
_N_SEG = 2
_POLY_DEG = 14


def _fit_pu21_log2_poly():
    edges = np.linspace(_U_LO, _U_HI, _N_SEG + 1)
    half = 0.5 * float(edges[1] - edges[0])
    centers = 0.5 * (edges[:-1] + edges[1:])
    t_fit = np.cos(np.pi * (np.arange(4096) + 0.5) / 4096.0)   # Chebyshev nodes
    t_chk = np.linspace(-1.0, 1.0, 40001)
    coef_list, fit_err = [], 0.0
    for c in centers:
        g_fit = _pu21_norm_np(np.exp2(c + half * t_fit))
        cheb = np.polynomial.chebyshev.chebfit(t_fit, g_fit, _POLY_DEG)
        pcoefs = np.polynomial.chebyshev.cheb2poly(cheb)        # ascending powers of t
        approx = np.polynomial.polynomial.polyval(t_chk, pcoefs)
        exact = _pu21_norm_np(np.exp2(c + half * t_chk))
        fit_err = max(fit_err, float(np.max(np.abs(approx - exact))))
        coef_list.append(tuple(float(v) for v in pcoefs))
    return tuple(coef_list), tuple(float(c) for c in centers), half, fit_err


_PU_POLY_COEFS, _PU_SEG_CENTERS, _PU_SEG_HALF, _PU_POLY_ERR = _fit_pu21_log2_poly()


# ---- Pallas kernel -----------------------------------------------------------
def _horner(t, coefs):
    acc = jnp.full_like(t, coefs[-1])
    for c in coefs[-2::-1]:
        acc = acc * t + c
    return acc


def _pu21_poly(u):
    """Piecewise-polynomial normalized PU21 encode, evaluated at u = log2(Y)."""
    inv_h = 1.0 / _PU_SEG_HALF
    v = None
    for center, coefs in zip(_PU_SEG_CENTERS, _PU_POLY_COEFS):
        t = (u - center) * inv_h
        p = _horner(t, coefs)
        v = p if v is None else jnp.where(u >= center - _PU_SEG_HALF, p, v)
    return v


def _pu_transform_kernel(x_ref, scale_ref, offset_ref, o_ref, *, use_poly):
    # One (1, C, ts, L) tile per grid step.  scale/offset are (1, C, 1, 1) and
    # broadcast over the spatial dims -> per-channel FMA.
    # clip BEFORE the log: keeps padded/partial-tile garbage finite.
    y = jnp.clip(x_ref[...].astype(jnp.float32), Y_MIN, Y_MAX)
    u = jnp.log2(y)                                    # the only EUP op (poly path)
    if use_poly:
        v = _pu21_poly(u)                              # VPU-only piecewise polynomial
    else:
        # Exact PU21, written with native exp2/log2 (EUP-heavy reference path):
        #   V = p6 * (((p0 + p1*y^p3) / (1 + p2*y^p3))^p4 - p5)
        # p6/-p5 and the PU->[0,1] map are folded into scale/offset below.
        yp = jnp.exp2(P3 * u)
        frac = (P0 + P1 * yp) / (1.0 + P2 * yp)
        v = jnp.exp2(P4 * jnp.log2(frac))
    o_ref[...] = (v * scale_ref[...] + offset_ref[...]).astype(o_ref.dtype)


# ---- wrapper -----------------------------------------------------------------
def _cdiv(a, b):
    return -(-a // b)


def _round_up(a, b):
    return _cdiv(a, b) * b


def pu_transform_wrapper(x, mean, std, *,
                         out_dtype=jnp.float32,
                         target_tile_bytes=4 * 1024 * 1024,
                         use_polynomial=True):
    """x: (N, C, H, W) linear luminance (cd/m^2); mean/std: (C,)."""
    N, C, H, W = x.shape
    P = H * W
    in_bytes = np.dtype(x.dtype).itemsize
    out_bytes = np.dtype(out_dtype).itemsize

    mean = jnp.asarray(mean, jnp.float32).reshape(1, C, 1, 1)
    std = jnp.asarray(std, jnp.float32).reshape(1, C, 1, 1)
    if use_polynomial:
        # poly emits the [0,1]-normalized PU value directly -> fold only mean/std
        scale = 1.0 / std
        offset = -mean / std
    else:
        # fold p6, p5, PU range and (x - mean)/std into one per-channel FMA
        scale = (P6 * PU_INV_RANGE) / std
        offset = ((-P6 * P5 - PU_LO) * PU_INV_RANGE - mean) / std

    # ---- layout: lane-dense flatten when possible; never pad/slice in HBM ----
    if P % 128 == 0:
        L = next(l for l in (1024, 512, 256, 128) if P % l == 0)
        rows = P // L
        xk = x.reshape(N, C, rows, L)      # contiguous -> metadata-only reshape
    else:
        # Ragged plane: keep (H, W); last block dim = full W (masked stores,
        # but no extra pad + slice HBM passes).
        L, rows = W, H
        xk = x

    # ---- balanced, dtype-aware row blocks -------------------------------------
    bytes_per_row = C * L * (in_bytes + out_bytes)
    T = max(1, _cdiv(rows * bytes_per_row, target_tile_bytes))
    if T == 1 or rows <= 8:
        ts, T = rows, 1
    else:
        ts = _round_up(_cdiv(rows, T), 8)
        if ts >= rows:
            ts, T = rows, 1
        else:
            T = _cdiv(rows, ts)

    kernel = functools.partial(_pu_transform_kernel, use_poly=use_polynomial)
    out = pl.pallas_call(
        kernel,
        out_shape=jax.ShapeDtypeStruct((N, C, rows, L), out_dtype),
        grid=(N, T),
        in_specs=[
            pl.BlockSpec((1, C, ts, L), lambda n, t: (n, 0, t, 0)),
            pl.BlockSpec((1, C, 1, 1), lambda n, t: (0, 0, 0, 0)),
            pl.BlockSpec((1, C, 1, 1), lambda n, t: (0, 0, 0, 0)),
        ],
        out_specs=pl.BlockSpec((1, C, ts, L), lambda n, t: (n, 0, t, 0)),
        compiler_params=pltpu.CompilerParams(
            # TODO(synk): on v7x mark the row-block axis pltpu.CORE_PARALLEL (or
            # split the grid with pl.core_map) so both TensorCores are guaranteed
            # to share the work; plain "parallel" is kept here since it is safe
            # on single-core v5e/v6e.
            dimension_semantics=("parallel", "parallel"),
            # ~4 MiB in + ~4 MiB out, double-buffered, stays far below this and
            # below v7x's 64 MiB physical VMEM.
            vmem_limit_bytes=48 * 1024 * 1024,
        ),
    )(xk, scale, offset)

    return out.reshape(N, C, H, W)


# ---- pure-JAX reference for verification ------------------------------------
def pu_transform_ref(x, mean, std):
    y = jnp.clip(x.astype(jnp.float32), Y_MIN, Y_MAX)
    yp = jnp.power(y, P3)
    v = P6 * (jnp.power((P0 + P1 * yp) / (1.0 + P2 * yp), P4) - P5)
    v = (v - PU_LO) * PU_INV_RANGE
    return (v - mean[None, :, None, None]) / std[None, :, None, None]


if __name__ == "__main__":
    key = jax.random.PRNGKey(0)

    # normalize_mean_std_imagenet=False -> mean=std=0.5 per channel
    mean_list = [0.5, 0.5, 0.5]
    std_list = [0.5, 0.5, 0.5]
    mean_arr = jnp.asarray(mean_list, jnp.float32)
    std_arr = jnp.asarray(std_list, jnp.float32)
    min_std = float(np.min(std_list))

    # Sanity check the import-time fit (a gross fitting bug would trip this).
    assert _PU_POLY_ERR < 5e-3, f"PU21 polynomial fit error too large: {_PU_POLY_ERR}"
    # Tolerance for the approximate path is derived from the measured fit error
    # (+ slack for f32 Horner evaluation), propagated through the 1/std scaling.
    atol_poly = (4.0 * _PU_POLY_ERR + 3e-4) / min_std

    # (shape, minval, maxval, kwargs) — exercises: lane-dense plane (rows=1),
    # ragged plane kept in (H, W) layout, multi-block grid with partial last
    # block, and full HDR range with clipping at both ends.
    cases = [
        ((2, 3, 16, 16), 0.01, 100.0, {}),
        ((1, 3, 24, 40), 0.01, 100.0, {}),
        ((1, 3, 48, 256), 0.02, 80.0, {"target_tile_bytes": 32 * 1024}),
        ((2, 3, 32, 128), 1e-3, 12000.0, {}),
    ]
    for i, (shape, lo, hi, kwargs) in enumerate(cases):
        k = jax.random.fold_in(key, i)
        x = jax.random.uniform(k, shape, dtype=jnp.float32, minval=lo, maxval=hi)
        ref = np.asarray(pu_transform_ref(x, mean_arr, std_arr))

        out_poly = jax.block_until_ready(
            pu_transform_wrapper(x, mean_list, std_list, use_polynomial=True, **kwargs))
        np.testing.assert_allclose(np.asarray(out_poly), ref, rtol=0.0, atol=atol_poly)

        out_exact = jax.block_until_ready(
            pu_transform_wrapper(x, mean_list, std_list, use_polynomial=False, **kwargs))
        np.testing.assert_allclose(np.asarray(out_exact), ref, rtol=5e-5, atol=5e-5)

    # bf16 output knob (halves store traffic when the consumer is bf16).
    xb = jax.random.uniform(jax.random.fold_in(key, 99), (2, 3, 16, 16),
                            dtype=jnp.float32, minval=0.01, maxval=100.0)
    out_bf16 = jax.block_until_ready(
        pu_transform_wrapper(xb, mean_list, std_list, out_dtype=jnp.bfloat16))
    refb = np.asarray(pu_transform_ref(xb, mean_arr, std_arr))
    np.testing.assert_allclose(np.asarray(out_bf16, dtype=np.float32), refb,
                               rtol=0.0, atol=2e-2)

    print("KERNEL_OK")
</pallas_src>

<mosaic_0001>
module attributes {stable_mosaic.version = 11 : i64} {
  func.func @_pu_transform_kernel(%arg0: i32, %arg1: i32, %arg2: memref<1x3x1x256xf32, #tpu.memory_space<vmem>>, %arg3: memref<1x3x1x1xf32, #tpu.memory_space<vmem>>, %arg4: memref<1x3x1x1xf32, #tpu.memory_space<vmem>>, %arg5: memref<1x3x1x256xf32, #tpu.memory_space<vmem>>) attributes {dimension_semantics = [#tpu.dimension_semantics<parallel>, #tpu.dimension_semantics<parallel>], iteration_bounds = array<i64: 2, 1>, scalar_prefetch = 0 : i64, scratch_operands = 0 : i64, tpu.core_type = #tpu.core_type<tc>, window_params = [{transform_indices = @transform_0, window_bounds = array<i64: 1, 3, 1, 256>}, {pipeline_mode = #tpu.pipeline_mode<synchronous>, transform_indices = @transform_1, window_bounds = array<i64: 1, 3, 1, 1>}, {pipeline_mode = #tpu.pipeline_mode<synchronous>, transform_indices = @transform_2, window_bounds = array<i64: 1, 3, 1, 1>}, {transform_indices = @transform_3, window_bounds = array<i64: 1, 3, 1, 256>}]} {
    %c0 = arith.constant 0 : index
    %c0_0 = arith.constant 0 : index
    %c0_1 = arith.constant 0 : index
    %c0_2 = arith.constant 0 : index
    %0 = vector.load %arg2[%c0, %c0_0, %c0_1, %c0_2] : memref<1x3x1x256xf32, #tpu.memory_space<vmem>>, vector<1x3x1x256xf32>
    %cst = arith.constant 5.000000e-03 : f32
    %cst_3 = arith.constant 1.000000e+04 : f32
    %1 = vector.broadcast %cst : f32 to vector<1x3x1x256xf32>
    %2 = arith.maximumf %1, %0 : vector<1x3x1x256xf32>
    %3 = vector.broadcast %cst_3 : f32 to vector<1x3x1x256xf32>
    %4 = arith.minimumf %3, %2 : vector<1x3x1x256xf32>
    %5 = math.log %4 : vector<1x3x1x256xf32>
    %cst_4 = arith.constant 2.000000e+00 : f32
    %6 = math.log %cst_4 : f32
    %7 = vector.broadcast %6 : f32 to vector<1x3x1x256xf32>
    %8 = arith.divf %5, %7 : vector<1x3x1x256xf32>
    %cst_5 = arith.constant -2.41096401 : f32
    %9 = vector.broadcast %cst_5 : f32 to vector<1x3x1x256xf32>
    %10 = arith.subf %8, %9 : vector<1x3x1x256xf32>
    %cst_6 = arith.constant 0.191098914 : f32
    %11 = vector.broadcast %cst_6 : f32 to vector<1x3x1x256xf32>
    %12 = arith.mulf %10, %11 : vector<1x3x1x256xf32>
    %cst_7 = arith.constant -4.48893668E-4 : f32
    %13 = vector.broadcast %cst_7 : f32 to vector<1x3x1x256xf32>
    %14 = arith.mulf %13, %12 : vector<1x3x1x256xf32>
    %cst_8 = arith.constant 0.00233010226 : f32
    %15 = vector.broadcast %cst_8 : f32 to vector<1x3x1x256xf32>
    %16 = arith.addf %14, %15 : vector<1x3x1x256xf32>
    %17 = arith.mulf %16, %12 : vector<1x3x1x256xf32>
    %cst_9 = arith.constant 0.00426167343 : f32
    %18 = vector.broadcast %cst_9 : f32 to vector<1x3x1x256xf32>
    %19 = arith.addf %17, %18 : vector<1x3x1x256xf32>
    %20 = arith.mulf %19, %12 : vector<1x3x1x256xf32>
    %cst_10 = arith.constant -0.00940932427 : f32
    %21 = vector.broadcast %cst_10 : f32 to vector<1x3x1x256xf32>
    %22 = arith.addf %20, %21 : vector<1x3x1x256xf32>
    %23 = arith.mulf %22, %12 : vector<1x3x1x256xf32>
    %cst_11 = arith.constant -0.016535962 : f32
    %24 = vector.broadcast %cst_11 : f32 to vector<1x3x1x256xf32>
    %25 = arith.addf %23, %24 : vector<1x3x1x256xf32>
    %26 = arith.mulf %25, %12 : vector<1x3x1x256xf32>
    %cst_12 = arith.constant 0.0125118112 : f32
    %27 = vector.broadcast %cst_12 : f32 to vector<1x3x1x256xf32>
    %28 = arith.addf %26, %27 : vector<1x3x1x256xf32>
    %29 = arith.mulf %28, %12 : vector<1x3x1x256xf32>
    %cst_13 = arith.constant 0.0362523124 : f32
    %30 = vector.broadcast %cst_13 : f32 to vector<1x3x1x256xf32>
    %31 = arith.addf %29, %30 : vector<1x3x1x256xf32>
    %32 = arith.mulf %31, %12 : vector<1x3x1x256xf32>
    %cst_14 = arith.constant 0.00623273617 : f32
    %33 = vector.broadcast %cst_14 : f32 to vector<1x3x1x256xf32>
    %34 = arith.addf %32, %33 : vector<1x3x1x256xf32>
    %35 = arith.mulf %34, %12 : vector<1x3x1x256xf32>
    %cst_15 = arith.constant -0.0474891439 : f32
    %36 = vector.broadcast %cst_15 : f32 to vector<1x3x1x256xf32>
    %37 = arith.addf %35, %36 : vector<1x3x1x256xf32>
    %38 = arith.mulf %37, %12 : vector<1x3x1x256xf32>
    %cst_16 = arith.constant -0.0552990846 : f32
    %39 = vector.broadcast %cst_16 : f32 to vector<1x3x1x256xf32>
    %40 = arith.addf %38, %39 : vector<1x3x1x256xf32>
    %41 = arith.mulf %40, %12 : vector<1x3x1x256xf32>
    %cst_17 = arith.constant 0.0176916141 : f32
    %42 = vector.broadcast %cst_17 : f32 to vector<1x3x1x256xf32>
    %43 = arith.addf %41, %42 : vector<1x3x1x256xf32>
    %44 = arith.mulf %43, %12 : vector<1x3x1x256xf32>
    %cst_18 = arith.constant 0.130076647 : f32
    %45 = vector.broadcast %cst_18 : f32 to vector<1x3x1x256xf32>
    %46 = arith.addf %44, %45 : vector<1x3x1x256xf32>
    %47 = arith.mulf %46, %12 : vector<1x3x1x256xf32>
    %cst_19 = arith.constant 0.187371418 : f32
    %48 = vector.broadcast %cst_19 : f32 to vector<1x3x1x256xf32>
    %49 = arith.addf %47, %48 : vector<1x3x1x256xf32>
    %50 = arith.mulf %49, %12 : vector<1x3x1x256xf32>
    %cst_20 = arith.constant 0.139691249 : f32
    %51 = vector.broadcast %cst_20 : f32 to vector<1x3x1x256xf32>
    %52 = arith.addf %50, %51 : vector<1x3x1x256xf32>
    %53 = arith.mulf %52, %12 : vector<1x3x1x256xf32>
    %cst_21 = arith.constant 0.0450310446 : f32
    %54 = vector.broadcast %cst_21 : f32 to vector<1x3x1x256xf32>
    %55 = arith.addf %53, %54 : vector<1x3x1x256xf32>
    %cst_22 = arith.constant 8.054820e+00 : f32
    %56 = vector.broadcast %cst_22 : f32 to vector<1x3x1x256xf32>
    %57 = arith.subf %8, %56 : vector<1x3x1x256xf32>
    %cst_23 = arith.constant 0.191098914 : f32
    %58 = vector.broadcast %cst_23 : f32 to vector<1x3x1x256xf32>
    %59 = arith.mulf %57, %58 : vector<1x3x1x256xf32>
    %cst_24 = arith.constant -3.86141619E-5 : f32
    %60 = vector.broadcast %cst_24 : f32 to vector<1x3x1x256xf32>
    %61 = arith.mulf %60, %59 : vector<1x3x1x256xf32>
    %cst_25 = arith.constant -1.03986356E-4 : f32
    %62 = vector.broadcast %cst_25 : f32 to vector<1x3x1x256xf32>
    %63 = arith.addf %61, %62 : vector<1x3x1x256xf32>
    %64 = arith.mulf %63, %59 : vector<1x3x1x256xf32>
    %cst_26 = arith.constant 8.52696302E-6 : f32
    %65 = vector.broadcast %cst_26 : f32 to vector<1x3x1x256xf32>
    %66 = arith.addf %64, %65 : vector<1x3x1x256xf32>
    %67 = arith.mulf %66, %59 : vector<1x3x1x256xf32>
    %cst_27 = arith.constant 3.87900131E-4 : f32
    %68 = vector.broadcast %cst_27 : f32 to vector<1x3x1x256xf32>
    %69 = arith.addf %67, %68 : vector<1x3x1x256xf32>
    %70 = arith.mulf %69, %59 : vector<1x3x1x256xf32>
    %cst_28 = arith.constant 3.93134047E-4 : f32
    %71 = vector.broadcast %cst_28 : f32 to vector<1x3x1x256xf32>
    %72 = arith.addf %70, %71 : vector<1x3x1x256xf32>
    %73 = arith.mulf %72, %59 : vector<1x3x1x256xf32>
    %cst_29 = arith.constant 5.8524427E-4 : f32
    %74 = vector.broadcast %cst_29 : f32 to vector<1x3x1x256xf32>
    %75 = arith.addf %73, %74 : vector<1x3x1x256xf32>
    %76 = arith.mulf %75, %59 : vector<1x3x1x256xf32>
    %cst_30 = arith.constant 4.219360e-04 : f32
    %77 = vector.broadcast %cst_30 : f32 to vector<1x3x1x256xf32>
    %78 = arith.addf %76, %77 : vector<1x3x1x256xf32>
    %79 = arith.mulf %78, %59 : vector<1x3x1x256xf32>
    %cst_31 = arith.constant -0.00166158041 : f32
    %80 = vector.broadcast %cst_31 : f32 to vector<1x3x1x256xf32>
    %81 = arith.addf %79, %80 : vector<1x3x1x256xf32>
    %82 = arith.mulf %81, %59 : vector<1x3x1x256xf32>
    %cst_32 = arith.constant -0.00244046142 : f32
    %83 = vector.broadcast %cst_32 : f32 to vector<1x3x1x256xf32>
    %84 = arith.addf %82, %83 : vector<1x3x1x256xf32>
    %85 = arith.mulf %84, %59 : vector<1x3x1x256xf32>
    %cst_33 = arith.constant -0.0136372028 : f32
    %86 = vector.broadcast %cst_33 : f32 to vector<1x3x1x256xf32>
    %87 = arith.addf %85, %86 : vector<1x3x1x256xf32>
    %88 = arith.mulf %87, %59 : vector<1x3x1x256xf32>
    %cst_34 = arith.constant -9.649250e-03 : f32
    %89 = vector.broadcast %cst_34 : f32 to vector<1x3x1x256xf32>
    %90 = arith.addf %88, %89 : vector<1x3x1x256xf32>
    %91 = arith.mulf %90, %59 : vector<1x3x1x256xf32>
    %cst_35 = arith.constant -0.0273571983 : f32
    %92 = vector.broadcast %cst_35 : f32 to vector<1x3x1x256xf32>
    %93 = arith.addf %91, %92 : vector<1x3x1x256xf32>
    %94 = arith.mulf %93, %59 : vector<1x3x1x256xf32>
    %cst_36 = arith.constant 0.0234592576 : f32
    %95 = vector.broadcast %cst_36 : f32 to vector<1x3x1x256xf32>
    %96 = arith.addf %94, %95 : vector<1x3x1x256xf32>
    %97 = arith.mulf %96, %59 : vector<1x3x1x256xf32>
    %cst_37 = arith.constant 0.820771336 : f32
    %98 = vector.broadcast %cst_37 : f32 to vector<1x3x1x256xf32>
    %99 = arith.addf %97, %98 : vector<1x3x1x256xf32>
    %100 = arith.mulf %99, %59 : vector<1x3x1x256xf32>
    %cst_38 = arith.constant 1.21909809 : f32
    %101 = vector.broadcast %cst_38 : f32 to vector<1x3x1x256xf32>
    %102 = arith.addf %100, %101 : vector<1x3x1x256xf32>
    %cst_39 = arith.constant 2.82192802 : f32
    %103 = vector.broadcast %cst_39 : f32 to vector<1x3x1x256xf32>
    %104 = arith.cmpf oge, %8, %103 : vector<1x3x1x256xf32>
    %105 = arith.select %104, %102, %55 : vector<1x3x1x256xi1>, vector<1x3x1x256xf32>
    %c0_40 = arith.constant 0 : index
    %c0_41 = arith.constant 0 : index
    %c0_42 = arith.constant 0 : index
    %c0_43 = arith.constant 0 : index
    %106 = vector.load %arg3[%c0_40, %c0_41, %c0_42, %c0_43] : memref<1x3x1x1xf32, #tpu.memory_space<vmem>>, vector<1x3x1x1xf32>
    %107 = vector.broadcast %106 : vector<1x3x1x1xf32> to vector<1x3x1x256xf32>
    %108 = arith.mulf %105, %107 : vector<1x3x1x256xf32>
    %c0_44 = arith.constant 0 : index
    %c0_45 = arith.constant 0 : index
    %c0_46 = arith.constant 0 : index
    %c0_47 = arith.constant 0 : index
    %109 = vector.load %arg4[%c0_44, %c0_45, %c0_46, %c0_47] : memref<1x3x1x1xf32, #tpu.memory_space<vmem>>, vector<1x3x1x1xf32>
    %110 = vector.broadcast %109 : vector<1x3x1x1xf32> to vector<1x3x1x256xf32>
    %111 = arith.addf %108, %110 : vector<1x3x1x256xf32>
    %c0_48 = arith.constant 0 : index
    %c0_49 = arith.constant 0 : index
    %c0_50 = arith.constant 0 : index
    %c0_51 = arith.constant 0 : index
    %112 = vector.load %arg5[%c0_48, %c0_49, %c0_50, %c0_51] : memref<1x3x1x256xf32, #tpu.memory_space<vmem>>, vector<1x3x1x256xf32>
    tpu.vector_store %arg5[%c0_48, %c0_49, %c0_50, %c0_51], %111 {strides = array<i32>} : memref<1x3x1x256xf32, #tpu.memory_space<vmem>>, vector<1x3x1x256xf32>,
    return
  }
  func.func @transform_0(%arg0: i32, %arg1: i32) -> (i32, i32, i32, i32) {
    %c0_i32 = arith.constant 0 : i32
    %c0_i32_0 = arith.constant 0 : i32
    %c0_i32_1 = arith.constant 0 : i32
    return %arg0, %c0_i32, %arg1, %c0_i32_0 : i32, i32, i32, i32
  }
  func.func @transform_1(%arg0: i32, %arg1: i32) -> (i32, i32, i32, i32) {
    %c0_i32 = arith.constant 0 : i32
    %c0_i32_0 = arith.constant 0 : i32
    %c0_i32_1 = arith.constant 0 : i32
    %c0_i32_2 = arith.constant 0 : i32
    %c0_i32_3 = arith.constant 0 : i32
    return %c0_i32, %c0_i32_0, %c0_i32_1, %c0_i32_2 : i32, i32, i32, i32
  }
  func.func @transform_2(%arg0: i32, %arg1: i32) -> (i32, i32, i32, i32) {
    %c0_i32 = arith.constant 0 : i32
    %c0_i32_0 = arith.constant 0 : i32
    %c0_i32_1 = arith.constant 0 : i32
    %c0_i32_2 = arith.constant 0 : i32
    %c0_i32_3 = arith.constant 0 : i32
    return %c0_i32, %c0_i32_0, %c0_i32_1, %c0_i32_2 : i32, i32, i32, i32
  }
  func.func @transform_3(%arg0: i32, %arg1: i32) -> (i32, i32, i32, i32) {
    %c0_i32 = arith.constant 0 : i32
    %c0_i32_0 = arith.constant 0 : i32
    %c0_i32_1 = arith.constant 0 : i32
    return %arg0, %c0_i32, %arg1, %c0_i32_0 : i32, i32, i32, i32
  }
}

</mosaic_0001>

<llo_original>
// kernel: tpu_custom_call.1
$region0: #{tpu_custom_call.1}
  #allocation0 [shape = 'u32[]', space=smem, size = 0x4, offset = 0x4, fixed_abs, tag = 'smem constant byte address 0x4 - core index']
  #allocation1 [shape = 'u32[144,128]{1,0:T(1,128)}', space=vmem, size = 0x12000, scoped, tag = 'internal scratch']
  %s0 = inlined_call_operand.hbm [shape: f32[2,3,1,256], index: 0, kind: input, shape index: {}]
  %s1 = inlined_call_operand.vmem [shape: f32[1,3,1,1], index: 1, kind: input, shape index: {}]
  %s2 = inlined_call_operand.vmem [shape: f32[1,3,1,1], index: 2, kind: input, shape index: {}]
  %s3 = inlined_call_operand.hbm [shape: f32[2,3,1,256], index: 3, kind: output, shape index: {}]
  %s4 = sld [smem:[#allocation0]]
  $region49: #{tpu_custom_call.1} parent=0
    _
  %s6 = ssub.s32 1, %s4
  %s7 = scalar_select 0, %s6, %s4
  $region1: #{tpu_custom_call.1} parent=0
    #allocation2 [shape = 'u8[6144]{0}', space=vmem, size = 0x1800, scoped, tag = 'input window, operand 0']
    #allocation3 [shape = 's32[2]{0}', space=sflag, size = 0x8, scoped, tag = 'scoped memory for tpu_custom_call.1']
    #allocation4 [shape = 's32[2]{0}', space=sflag, size = 0x8, scoped, tag = 'scoped memory for tpu_custom_call.1']
    #allocation5 [shape = 'u8[6144]{0}', space=vmem, size = 0x1800, scoped, tag = 'output window, operand 0']
    %8 = vsyncpa [#allocation3], 0
    %s9 = scalar_lea.sflag [#allocation3], 1
    %10 = vsyncpa %s9, 0
    %11 = vsyncpa [#allocation4], 0
    %s12 = scalar_lea.sflag [#allocation4], 1
    %13 = vsyncpa %s12, 0
    loop: start=0, step=1, limit=4
    $region2: #{tpu_custom_call.1} parent=1 // loop_pre_header
      _
    $region3: #{tpu_custom_call.1} parent=1 // loop_header
      %s15 = sphi 0, %s19
      %p16 = scmp.ge.s32.totalorder %s15, 4
      %s22 = sphi 0, %s34
      %s23 = sphi 0, %s30
      %s24 = sphi 0, %s22
      %s25 = sphi 0, %s23
      %s26 = sphi 0, %s24
      %s27 = sphi 0, %s25
      %s39 = sphi 0, %s41
      %s42 = sphi 0, %s39
      %s43 = sphi 0, %s42
      %s59 = sphi 0, %s43
      %s63 = sphi 0, %s63
      %s65 = sphi 0, %s63
      %s66 = sphi 0, %s65
      %s80 = sphi 0, %s66
      %s84 = sphi 0, %s84
      %s86 = sphi 0, %s84
      %s87 = sphi 0, %s86
      %s101 = sphi 0, %s87
      %s109 = sphi 0, %s111
      %s112 = sphi 0, %s109
      %s113 = sphi 0, %s112
      %s129 = sphi 0, %s113
    $region4: #{tpu_custom_call.1} parent=1 // loop_header_branch
      %18 = sbr.rel (%p16) target = $region8
    $region5: #{tpu_custom_call.1} parent=1 // loop_body
      %s20 = ssub.s32 %s15, 1
      %s21 = ssub.s32 %s15, 2
      %s28 = sadd.s32 1, %s23
      %p29 = scmp.ge.s32.totalorder %s28, 1
      %s30 = scalar_select %p29, 0, %s28
      %s31 = sadd.s32 1, %s22
      %s32 = scalar_select %p29, %s31, %s22
      %p33 = scmp.ge.s32.totalorder %s32, 2
      %s34 = scalar_select %p33, 0, %s32
      %s35 = ssub.s32 %s22, %s34
      %s36 = ssub.s32 %s23, %s30
      %s37 = sor.u32 %s35, %s36
      %p38 = scmp.eq.s32.totalorder %s37, 0
      %s40 = sadd.s32 %s39, 1
      %s41 = scalar_select %p38, %s39, %s40
      %p44 = pneg %p38
      %p45 = scmp.eq.s32.totalorder %s15, 1
      %p46 = por %p44, %p45
      %p47 = scmp.ne.s32.totalorder %s39, %s42
      %p48 = scmp.eq.s32.totalorder %s15, 0
      %p49 = por %p47, %p48
      %p50 = scmp.ne.s32.totalorder %s39, %s42
      %p51 = scmp.eq.s32.totalorder %s20, 1
      %p52 = por %p50, %p51
      %p53 = scmp.ne.s32.totalorder %s42, %s43
      %p54 = scmp.eq.s32.totalorder %s20, 0
      %p55 = por %p53, %p54
      %p56 = scmp.ne.s32.totalorder %s42, %s43
      %p57 = scmp.eq.s32.totalorder %s21, 1
      %p58 = por %p56, %p57
      %p60 = scmp.ne.s32.totalorder %s43, %s59
      %p61 = scmp.eq.s32.totalorder %s21, 0
      %p62 = por %p60, %p61
      %s64 = sadd.s32 %s63, 1
      %p67 = scmp.eq.s32.totalorder %s15, 1
      %p68 = scmp.ne.s32.totalorder %s63, %s65
      %p69 = scmp.eq.s32.totalorder %s15, 0
      %p70 = por %p68, %p69
      %p71 = scmp.ne.s32.totalorder %s63, %s65
      %p72 = scmp.eq.s32.totalorder %s20, 1
      %p73 = por %p71, %p72
      %p74 = scmp.ne.s32.totalorder %s65, %s66
      %p75 = scmp.eq.s32.totalorder %s20, 0
      %p76 = por %p74, %p75
      %p77 = scmp.ne.s32.totalorder %s65, %s66
      %p78 = scmp.eq.s32.totalorder %s21, 1
      %p79 = por %p77, %p78
      %p81 = scmp.ne.s32.totalorder %s66, %s80
      %p82 = scmp.eq.s32.totalorder %s21, 0
      %p83 = por %p81, %p82
      %s85 = sadd.s32 %s84, 1
      %p88 = scmp.eq.s32.totalorder %s15, 1
      %p89 = scmp.ne.s32.totalorder %s84, %s86
      %p90 = scmp.eq.s32.totalorder %s15, 0
      %p91 = por %p89, %p90
      %p92 = scmp.ne.s32.totalorder %s84, %s86
      %p93 = scmp.eq.s32.totalorder %s20, 1
      %p94 = por %p92, %p93
      %p95 = scmp.ne.s32.totalorder %s86, %s87
      %p96 = scmp.eq.s32.totalorder %s20, 0
      %p97 = por %p95, %p96
      %p98 = scmp.ne.s32.totalorder %s86, %s87
      %p99 = scmp.eq.s32.totalorder %s21, 1
      %p100 = por %p98, %p99
      %p102 = scmp.ne.s32.totalorder %s87, %s101
      %p103 = scmp.eq.s32.totalorder %s21, 0
      %p104 = por %p102, %p103
      %s105 = ssub.s32 %s22, %s34
      %s106 = ssub.s32 %s23, %s30
      %s107 = sor.u32 %s105, %s106
      %p108 = scmp.eq.s32.totalorder %s107, 0
      %s110 = sadd.s32 %s109, 1
      %s111 = scalar_select %p108, %s109, %s110
      %p114 = pneg %p108
      %p115 = scmp.eq.s32.totalorder %s15, 1
      %p116 = por %p114, %p115
      %p117 = scmp.ne.s32.totalorder %s109, %s112
      %p118 = scmp.eq.s32.totalorder %s15, 0
      %p119 = por %p117, %p118
      %p120 = scmp.ne.s32.totalorder %s109, %s112
      %p121 = scmp.eq.s32.totalorder %s20, 1
      %p122 = por %p120, %p121
      %p123 = scmp.ne.s32.totalorder %s112, %s113
      %p124 = scmp.eq.s32.totalorder %s20, 0
      %p125 = por %p123, %p124
      %p126 = scmp.ne.s32.totalorder %s112, %s113
      %p127 = scmp.eq.s32.totalorder %s21, 1
      %p128 = por %p126, %p127
      %p130 = scmp.ne.s32.totalorder %s113, %s129
      %p131 = scmp.eq.s32.totalorder %s21, 0
      %p132 = por %p130, %p131
      %p133 = scmp.le.s32.totalorder 1, %s15
      %p134 = scmp.lt.s32.totalorder %s15, 3
      %p135 = pnand %p133, %p134
      %p136 = pneg %p135
      // Predicated region
      $region9: #{tpu_custom_call.1} parent=5 // pred_check
        _
      $region10: #{tpu_custom_call.1} parent=5 // pred_check_branch
        %138 = sbr.rel (%p135) target = $region12
      $region11: #{tpu_custom_call.1} parent=5 // pred_region
        %s139 = ssub.s32 %s15, 1
        // Predicated region
        $region13: #{tpu_custom_call.1} parent=11 // pred_check
          %p140 = pneg %p76
        $region14: #{tpu_custom_call.1} parent=11 // pred_check_branch
          %142 = sbr.rel (%p140) target = $region16
        $region15: #{tpu_custom_call.1} parent=11 // pred_region
          _
        $region16: #{tpu_custom_call.1} parent=11 // pred_fallthru
          _
        // Predicated region
        $region17: #{tpu_custom_call.1} parent=11 // pred_check
          %p143 = pneg %p97
        $region18: #{tpu_custom_call.1} parent=11 // pred_check_branch
          %145 = sbr.rel (%p143) target = $region20
        $region19: #{tpu_custom_call.1} parent=11 // pred_region
          _
        $region20: #{tpu_custom_call.1} parent=11 // pred_fallthru
          _
      $region12: #{tpu_custom_call.1} parent=5 // pred_fallthru
        _
      %p146 = scmp.lt.s32.totalorder %s15, 2
      // Predicated region
      $region21: #{tpu_custom_call.1} parent=5 // pred_check
        %p147 = pneg %p146
      $region22: #{tpu_custom_call.1} parent=5 // pred_check_branch
        %149 = sbr.rel (%p147) target = $region24
      $region23: #{tpu_custom_call.1} parent=5 // pred_region
        // Predicated region
        $region25: #{tpu_custom_call.1} parent=23 // pred_check
          %p150 = pneg %p49
        $region26: #{tpu_custom_call.1} parent=23 // pred_check_branch
          %152 = sbr.rel (%p150) target = $region28
        $region27: #{tpu_custom_call.1} parent=23 // pred_region
          %s153 = sand.u32 %s39, 1
          %s154 = scalar_lea.sflag [#allocation3], %s153
          %s155 = sand.u32 %s39, 1
          %s156 = smul.addr %s155, 6
          %s157 = scalar_lea.vmem [#allocation2], %s156
          %s159 = ssub.s32 96, 96
          %160 = vsyncadd %s154, %s159
          %s161 = smul.addr %s23, 2
          %s162 = smul.addr %s22, 6
          %s163 = sadd.s32 %s161, %s162
          %s164 = smul.addr %s163, 16
          %s165 = scalar_lea.hbm %s0, %s164
          %s166 = sshll.u32 %s157, 4
          %s167 = int_to_ptr.vmem [resolvable:$true] %s166
          %172 = dma.hbm_to_vmem [thread:$0]  %s165, 96, %s167, %s154, 32, 32, 2
        $region28: #{tpu_custom_call.1} parent=23 // pred_fallthru
          _
      $region24: #{tpu_custom_call.1} parent=5 // pred_fallthru
        _
      %p173 = scmp.le.s32.totalorder 1, %s15
      %p174 = scmp.lt.s32.totalorder %s15, 3
      %p175 = pnand %p173, %p174
      %p176 = pneg %p175
      // Predicated region
      $region29: #{tpu_custom_call.1} parent=5 // pred_check
        _
      $region30: #{tpu_custom_call.1} parent=5 // pred_check_branch
        %178 = sbr.rel (%p175) target = $region32
      $region31: #{tpu_custom_call.1} parent=5 // pred_region
        %s179 = ssub.s32 %s15, 1
        %s180 = sand.u32 %s42, 1
        %s181 = scalar_lea.sflag [#allocation3], %s180
        %s182 = sand.u32 %s42, 1
        %s183 = smul.addr %s182, 6
        %s184 = scalar_lea.vmem [#allocation2], %s183
        // Predicated region
        $region33: #{tpu_custom_call.1} parent=31 // pred_check
          %p185 = pneg %p55
        $region34: #{tpu_custom_call.1} parent=31 // pred_check_branch
          %187 = sbr.rel (%p185) target = $region36
        $region35: #{tpu_custom_call.1} parent=31 // pred_region
          %188 = dma.done %s181, 96
        $region36: #{tpu_custom_call.1} parent=31 // pred_fallthru
          _
        %s189 = sand.u32 %s42, 1
        %s190 = scalar_lea.sflag [#allocation3], %s189
        %s191 = sand.u32 %s42, 1
        %s192 = smul.addr %s191, 6
        %s193 = scalar_lea.vmem [#allocation2], %s192
        %p194 = pneg %p55
        %p195 = pneg %p52
        %p196 = pneg %p76
        %p197 = pneg %p73
        %p198 = pneg %p97
        %p199 = pneg %p94
        %p200 = pneg %p125
        %p201 = pneg %p122
        %s202 = sand.u32 %s112, 1
        %s203 = scalar_lea.sflag [#allocation4], %s202
        %s204 = sand.u32 %s112, 1
        %s205 = smul.addr %s204, 6
        %s206 = scalar_lea.vmem [#allocation5], %s205
        %v207 = vld [vmem:[%s184] sm:$0x3]
        %v208 = vld [vmem:[%s184 + $0x2] sm:$0x3]
        %v209 = vld [vmem:[%s184 + $0x4] sm:$0x3]
        %v210 = vmax.f32 %v207, 0.005
        %v211 = vmax.f32 %v208, 0.005
        %v212 = vmax.f32 %v209, 0.005
        %v213 = vmin.f32 %v210, 10000.0
        %v214 = vmin.f32 %v211, 10000.0
        %v215 = vmin.f32 %v212, 10000.0
        %v216 = vlog2.pop %v213
        %v217 = vmul.f32 %v216, 0.6931472
        %v218 = vlog2.pop %v214
        %v219 = vmul.f32 %v218, 0.6931472
        %v220 = vlog2.pop %v215
        %v221 = vmul.f32 %v220, 0.6931472
        %v222 = vrcp.pop 0.6931472
        %v223 = vmul.f32 %v217, %v222
        %v224 = vmul.f32 %v219, %v222
        %v225 = vmul.f32 %v221, %v222
        %v226 = vsub.f32 %v223, -2.410964
        %v227 = vsub.f32 %v224, -2.410964
        %v228 = vsub.f32 %v225, -2.410964
        %v229 = vmul.f32 %v226, 0.19109891
        %v230 = vmul.f32 %v227, 0.19109891
        %v231 = vmul.f32 %v228, 0.19109891
        %v232 = vmul.f32 %v229, -0.00044889367
        %v233 = vmul.f32 %v230, -0.00044889367
        %v234 = vmul.f32 %v231, -0.00044889367
        %v235 = vadd.f32 %v232, 0.0023301023
        %v236 = vadd.f32 %v233, 0.0023301023
        %v237 = vadd.f32 %v234, 0.0023301023
        %v238 = vmul.f32 %v235, %v229
        %v239 = vmul.f32 %v236, %v230
        %v240 = vmul.f32 %v237, %v231
        %v241 = vadd.f32 %v238, 0.0042616734
        %v242 = vadd.f32 %v239, 0.0042616734
        %v243 = vadd.f32 %v240, 0.0042616734
        %v244 = vmul.f32 %v241, %v229
        %v245 = vmul.f32 %v242, %v230
        %v246 = vmul.f32 %v243, %v231
        %v247 = vadd.f32 %v244, -0.009409324
        %v248 = vadd.f32 %v245, -0.009409324
        %v249 = vadd.f32 %v246, -0.009409324
        %v250 = vmul.f32 %v247, %v229
        %v251 = vmul.f32 %v248, %v230
        %v252 = vmul.f32 %v249, %v231
        %v253 = vadd.f32 %v250, -0.016535962
        %v254 = vadd.f32 %v251, -0.016535962
        %v255 = vadd.f32 %v252, -0.016535962
        %v256 = vmul.f32 %v253, %v229
        %v257 = vmul.f32 %v254, %v230
        %v258 = vmul.f32 %v255, %v231
        %v259 = vadd.f32 %v256, 0.012511811
        %v260 = vadd.f32 %v257, 0.012511811
        %v261 = vadd.f32 %v258, 0.012511811
        %v262 = vmul.f32 %v259, %v229
        %v263 = vmul.f32 %v260, %v230
        %v264 = vmul.f32 %v261, %v231
        %v265 = vadd.f32 %v262, 0.036252312
        %v266 = vadd.f32 %v263, 0.036252312
        %v267 = vadd.f32 %v264, 0.036252312
        %v268 = vmul.f32 %v265, %v229
        %v269 = vmul.f32 %v266, %v230
        %v270 = vmul.f32 %v267, %v231
        %v271 = vadd.f32 %v268, 0.006232736
        %v272 = vadd.f32 %v269, 0.006232736
        %v273 = vadd.f32 %v270, 0.006232736
        %v274 = vmul.f32 %v271, %v229
        %v275 = vmul.f32 %v272, %v230
        %v276 = vmul.f32 %v273, %v231
        %v277 = vadd.f32 %v274, -0.047489144
        %v278 = vadd.f32 %v275, -0.047489144
        %v279 = vadd.f32 %v276, -0.047489144
        %v280 = vmul.f32 %v277, %v229
        %v281 = vmul.f32 %v278, %v230
        %v282 = vmul.f32 %v279, %v231
        %v283 = vadd.f32 %v280, -0.055299085
        %v284 = vadd.f32 %v281, -0.055299085
        %v285 = vadd.f32 %v282, -0.055299085
        %v286 = vmul.f32 %v283, %v229
        %v287 = vmul.f32 %v284, %v230
        %v288 = vmul.f32 %v285, %v231
        %v289 = vadd.f32 %v286, 0.017691614
        %v290 = vadd.f32 %v287, 0.017691614
        %v291 = vadd.f32 %v288, 0.017691614
        %v292 = vmul.f32 %v289, %v229
        %v293 = vmul.f32 %v290, %v230
        %v294 = vmul.f32 %v291, %v231
        %v295 = vadd.f32 %v292, 0.13007665
        %v296 = vadd.f32 %v293, 0.13007665
        %v297 = vadd.f32 %v294, 0.13007665
        %v298 = vmul.f32 %v295, %v229
        %v299 = vmul.f32 %v296, %v230
        %v300 = vmul.f32 %v297, %v231
        %v301 = vadd.f32 %v298, 0.18737142
        %v302 = vadd.f32 %v299, 0.18737142
        %v303 = vadd.f32 %v300, 0.18737142
        %v304 = vmul.f32 %v301, %v229
        %v305 = vmul.f32 %v302, %v230
        %v306 = vmul.f32 %v303, %v231
        %v307 = vadd.f32 %v304, 0.13969125
        %v308 = vadd.f32 %v305, 0.13969125
        %v309 = vadd.f32 %v306, 0.13969125
        %v310 = vmul.f32 %v307, %v229
        %v311 = vmul.f32 %v308, %v230
        %v312 = vmul.f32 %v309, %v231
        %v313 = vadd.f32 %v310, 0.045031045
        %v314 = vadd.f32 %v311, 0.045031045
        %v315 = vadd.f32 %v312, 0.045031045
        %v316 = vsub.f32 %v223, 8.05482
        %v317 = vsub.f32 %v224, 8.05482
        %v318 = vsub.f32 %v225, 8.05482
        %v319 = vmul.f32 %v316, 0.19109891
        %v320 = vmul.f32 %v317, 0.19109891
        %v321 = vmul.f32 %v318, 0.19109891
        %v322 = vmul.f32 %v319, -3.8614162e-05
        %v323 = vmul.f32 %v320, -3.8614162e-05
        %v324 = vmul.f32 %v321, -3.8614162e-05
        %v325 = vadd.f32 %v322, -0.00010398636
        %v326 = vadd.f32 %v323, -0.00010398636
        %v327 = vadd.f32 %v324, -0.00010398636
        %v328 = vmul.f32 %v325, %v319
        %v329 = vmul.f32 %v326, %v320
        %v330 = vmul.f32 %v327, %v321
        %v331 = vadd.f32 %v328, 8.526963e-06
        %v332 = vadd.f32 %v329, 8.526963e-06
        %v333 = vadd.f32 %v330, 8.526963e-06
        %v334 = vmul.f32 %v331, %v319
        %v335 = vmul.f32 %v332, %v320
        %v336 = vmul.f32 %v333, %v321
        %v337 = vadd.f32 %v334, 0.00038790013
        %v338 = vadd.f32 %v335, 0.00038790013
        %v339 = vadd.f32 %v336, 0.00038790013
        %v340 = vmul.f32 %v337, %v319
        %v341 = vmul.f32 %v338, %v320
        %v342 = vmul.f32 %v339, %v321
        %v343 = vadd.f32 %v340, 0.00039313405
        %v344 = vadd.f32 %v341, 0.00039313405
        %v345 = vadd.f32 %v342, 0.00039313405
        %v346 = vmul.f32 %v343, %v319
        %v347 = vmul.f32 %v344, %v320
        %v348 = vmul.f32 %v345, %v321
        %v349 = vadd.f32 %v346, 0.00058524427
        %v350 = vadd.f32 %v347, 0.00058524427
        %v351 = vadd.f32 %v348, 0.00058524427
        %v352 = vmul.f32 %v349, %v319
        %v353 = vmul.f32 %v350, %v320
        %v354 = vmul.f32 %v351, %v321
        %v355 = vadd.f32 %v352, 0.000421936
        %v356 = vadd.f32 %v353, 0.000421936
        %v357 = vadd.f32 %v354, 0.000421936
        %v358 = vmul.f32 %v355, %v319
        %v359 = vmul.f32 %v356, %v320
        %v360 = vmul.f32 %v357, %v321
        %v361 = vadd.f32 %v358, -0.0016615804
        %v362 = vadd.f32 %v359, -0.0016615804
        %v363 = vadd.f32 %v360, -0.0016615804
        %v364 = vmul.f32 %v361, %v319
        %v365 = vmul.f32 %v362, %v320
        %v366 = vmul.f32 %v363, %v321
        %v367 = vadd.f32 %v364, -0.0024404614
        %v368 = vadd.f32 %v365, -0.0024404614
        %v369 = vadd.f32 %v366, -0.0024404614
        %v370 = vmul.f32 %v367, %v319
        %v371 = vmul.f32 %v368, %v320
        %v372 = vmul.f32 %v369, %v321
        %v373 = vadd.f32 %v370, -0.013637203
        %v374 = vadd.f32 %v371, -0.013637203
        %v375 = vadd.f32 %v372, -0.013637203
        %v376 = vmul.f32 %v373, %v319
        %v377 = vmul.f32 %v374, %v320
        %v378 = vmul.f32 %v375, %v321
        %v379 = vadd.f32 %v376, -0.00964925
        %v380 = vadd.f32 %v377, -0.00964925
        %v381 = vadd.f32 %v378, -0.00964925
        %v382 = vmul.f32 %v379, %v319
        %v383 = vmul.f32 %v380, %v320
        %v384 = vmul.f32 %v381, %v321
        %v385 = vadd.f32 %v382, -0.027357198
        %v386 = vadd.f32 %v383, -0.027357198
        %v387 = vadd.f32 %v384, -0.027357198
        %v388 = vmul.f32 %v385, %v319
        %v389 = vmul.f32 %v386, %v320
        %v390 = vmul.f32 %v387, %v321
        %v391 = vadd.f32 %v388, 0.023459258
        %v392 = vadd.f32 %v389, 0.023459258
        %v393 = vadd.f32 %v390, 0.023459258
        %v394 = vmul.f32 %v391, %v319
        %v395 = vmul.f32 %v392, %v320
        %v396 = vmul.f32 %v393, %v321
        %v397 = vadd.f32 %v394, 0.82077134
        %v398 = vadd.f32 %v395, 0.82077134
        %v399 = vadd.f32 %v396, 0.82077134
        %v400 = vmul.f32 %v397, %v319
        %v401 = vmul.f32 %v398, %v320
        %v402 = vmul.f32 %v399, %v321
        %v403 = vadd.f32 %v400, 1.2190981
        %v404 = vadd.f32 %v401, 1.2190981
        %v405 = vadd.f32 %v402, 1.2190981
        %vm406 = vcmp.ge.f32.partialorder %v223, 2.821928
        %vm407 = vcmp.ge.f32.partialorder %v224, 2.821928
        %vm408 = vcmp.ge.f32.partialorder %v225, 2.821928
        %v409 = vsel %vm406, %v403, %v313
        %v410 = vsel %vm407, %v404, %v314
        %v411 = vsel %vm408, %v405, %v315
        %v412 = vld [vmem:[%s1] sm:$0x1]
        %v413 = vld [vmem:[%s1 + $0x1] sm:$0x1]
        %v414 = vld [vmem:[%s1 + $0x2] sm:$0x1]
        %416 = vset.pattern.permute.xlu0 0
        %417 = vperm.xlu0 %416, %v412
        %v418 = vpop.permute.xlu0 %417
        %v420 = vlaneseq
        %v421 = vshrl.u32 %v420, 7
        %v422 = vsub.s32 0, %v421
        %v423 = vrot.slane %v418, %v422
        %425 = vset.pattern.permute.xlu0 0
        %426 = vperm.xlu0 %425, %v413
        %v427 = vpop.permute.xlu0 %426
        %v429 = vlaneseq
        %v430 = vshrl.u32 %v429, 7
        %v431 = vsub.s32 0, %v430
        %v432 = vrot.slane %v427, %v431
        %434 = vset.pattern.permute.xlu0 0
        %435 = vperm.xlu0 %434, %v414
        %v436 = vpop.permute.xlu0 %435
        %v438 = vlaneseq
        %v439 = vshrl.u32 %v438, 7
        %v440 = vsub.s32 0, %v439
        %v441 = vrot.slane %v436, %v440
        %v442 = vmul.f32 %v409, %v423
        %v443 = vmul.f32 %v410, %v432
        %v444 = vmul.f32 %v411, %v441
        %v445 = vld [vmem:[%s2] sm:$0x1]
        %v446 = vld [vmem:[%s2 + $0x1] sm:$0x1]
        %v447 = vld [vmem:[%s2 + $0x2] sm:$0x1]
        %449 = vset.pattern.permute.xlu0 0
        %450 = vperm.xlu0 %449, %v445
        %v451 = vpop.permute.xlu0 %450
        %v453 = vlaneseq
        %v454 = vshrl.u32 %v453, 7
        %v455 = vsub.s32 0, %v454
        %v456 = vrot.slane %v451, %v455
        %458 = vset.pattern.permute.xlu0 0
        %459 = vperm.xlu0 %458, %v446
        %v460 = vpop.permute.xlu0 %459
        %v462 = vlaneseq
        %v463 = vshrl.u32 %v462, 7
        %v464 = vsub.s32 0, %v463
        %v465 = vrot.slane %v460, %v464
        %467 = vset.pattern.permute.xlu0 0
        %468 = vperm.xlu0 %467, %v447
        %v469 = vpop.permute.xlu0 %468
        %v471 = vlaneseq
        %v472 = vshrl.u32 %v471, 7
        %v473 = vsub.s32 0, %v472
        %v474 = vrot.slane %v469, %v473
        %v475 = vadd.f32 %v442, %v456
        %v476 = vadd.f32 %v443, %v465
        %v477 = vadd.f32 %v444, %v474
        %v478 = vlaneseq
        %vm479 = vcmp.ge.s32.totalorder %v478, 0
        %vm480 = vcmp.lt.s32.totalorder %v478, 256
        %vm481 = vmand %vm479, %vm480
        %482 = vst.msk [vmem:[%s206] sm:$0x3] %vm481, %v475
        %483 = vst.msk [vmem:[%s206 + $0x2] sm:$0x3] %vm481, %v476
        %484 = vst.msk [vmem:[%s206 + $0x4] sm:$0x3] %vm481, %v477
        %s485 = sand.u32 %s112, 1
        %s486 = scalar_lea.sflag [#allocation4], %s485
        %s487 = sand.u32 %s112, 1
        %s488 = smul.addr %s487, 6
        %s489 = scalar_lea.vmem [#allocation5], %s488
        // Predicated region
        $region37: #{tpu_custom_call.1} parent=31 // pred_check
          %p490 = pneg %p122
        $region38: #{tpu_custom_call.1} parent=31 // pred_check_branch
          %492 = sbr.rel (%p490) target = $region40
        $region39: #{tpu_custom_call.1} parent=31 // pred_region
          %s494 = ssub.s32 96, 96
          %495 = vsyncadd %s486, %s494
          %s496 = smul.addr %s25, 2
          %s497 = smul.addr %s24, 6
          %s498 = sadd.s32 %s496, %s497
          %s499 = smul.addr %s498, 16
          %s500 = scalar_lea.hbm %s3, %s499
          %s501 = sshll.u32 %s489, 4
          %s502 = int_to_ptr.vmem [resolvable:$true] %s501
          %507 = dma.vmem_to_hbm [thread:$0]  %s502, 96, %s500, %s486, 32, 32, 2
        $region40: #{tpu_custom_call.1} parent=31 // pred_fallthru
          _
      $region32: #{tpu_custom_call.1} parent=5 // pred_fallthru
        _
      %p508 = scmp.le.s32.totalorder 2, %s15
      // Predicated region
      $region41: #{tpu_custom_call.1} parent=5 // pred_check
        %p509 = pneg %p508
      $region42: #{tpu_custom_call.1} parent=5 // pred_check_branch
        %511 = sbr.rel (%p509) target = $region44
      $region43: #{tpu_custom_call.1} parent=5 // pred_region
        %s512 = ssub.s32 %s15, 2
        // Predicated region
        $region45: #{tpu_custom_call.1} parent=43 // pred_check
          %p513 = pneg %p128
        $region46: #{tpu_custom_call.1} parent=43 // pred_check_branch
          %515 = sbr.rel (%p513) target = $region48
        $region47: #{tpu_custom_call.1} parent=43 // pred_region
          %s516 = sand.u32 %s113, 1
          %s517 = scalar_lea.sflag [#allocation4], %s516
          %s518 = sand.u32 %s113, 1
          %s519 = smul.addr %s518, 6
          %s520 = scalar_lea.vmem [#allocation5], %s519
          %521 = dma.done %s517, 96
        $region48: #{tpu_custom_call.1} parent=43 // pred_fallthru
          _
      $region44: #{tpu_custom_call.1} parent=5 // pred_fallthru
        _
    $region6: #{tpu_custom_call.1} parent=1 // loop_footer
      %s19 = sadd.s32 1, %s15
    $region7: #{tpu_custom_call.1} parent=1 // loop_footer_branch
      %14 = sbr.rel target = $region3
    $region8: #{tpu_custom_call.1} parent=1 // loop_exit
      _
    %522 = vsyncpa [#allocation3], 1
    %s523 = scalar_lea.sflag [#allocation3], 1
    %524 = vsyncpa %s523, 1
    %525 = vsyncpa [#allocation4], 1
    %s526 = scalar_lea.sflag [#allocation4], 1
    %527 = vsyncpa %s526, 1

</llo_original>
